<compile_context>
chip_gen: v7x
topology: tpu7x:2x2x1
jax: 0.10.0
libtpu: 0.0.40
codegen_flags: <defaults>
</compile_context>

<pallas_src>
import functools

import jax
import jax.numpy as jnp
from jax.experimental import pallas as pl
from jax.experimental.pallas import tpu as pltpu

_LANE = 128
_SUBLANE = 8


def _round_up(x: int, m: int) -> int:
    return ((x + m - 1) // m) * m


def _tile_bytes(shape, dtype) -> int:
    """VMEM footprint of one tile, accounting for (8, 128) sublane/lane padding."""
    padded = (*shape[:-2],
              _round_up(shape[-2], _SUBLANE),
              _round_up(shape[-1], _LANE))
    n = 1
    for d in padded:
        n *= d
    return n * jnp.dtype(dtype).itemsize


def _resident_spec(block_shape, index_map):
    """BlockSpec for a grid-invariant operand: single-buffered — double-buffering
    a block whose index never changes only doubles its VMEM footprint."""
    return pl.BlockSpec(block_shape, index_map, pipeline_mode=pl.Buffered(1))


# --------------------------------------------------------------------------- #
# Kernels                                                                      #
# --------------------------------------------------------------------------- #
def lin_kernel_fused(x_ref, w1_ref, b1_ref, w2_ref, b2_ref, o_ref):
    """Whole reduction dim resident: exp(relu(x @ W1 + b1) @ W2 + b2)."""
    # Cast x to the weight dtype in-kernel (bf16 MXU fast path when weights are
    # stored bf16 at rest); accumulate in f32 on the MXU.
    h = jnp.dot(x_ref[...].astype(w1_ref.dtype), w1_ref[...],
                preferred_element_type=jnp.float32)
    h = jnp.maximum(h + b1_ref[...], 0.0)               # bias + ReLU in f32
    out = jnp.dot(h.astype(w2_ref.dtype), w2_ref[...],
                  preferred_element_type=jnp.float32)
    o_ref[...] = jnp.exp(out + b2_ref[...]).astype(o_ref.dtype)


def lin_kernel_ktiled(x_ref, w1_ref, b1_ref, w2_ref, b2_ref, o_ref, acc_ref):
    """K-tiled first matmul (D_in split across the trailing 'arbitrary' grid
    axis) with an f32 VMEM accumulator; epilogue runs on the last K step."""
    k = pl.program_id(1)

    @pl.when(k == 0)
    def _():
        acc_ref[...] = jnp.zeros_like(acc_ref)

    acc_ref[...] += jnp.dot(x_ref[...].astype(w1_ref.dtype), w1_ref[...],
                            preferred_element_type=jnp.float32)

    @pl.when(k == pl.num_programs(1) - 1)
    def _():
        h = jnp.maximum(acc_ref[...] + b1_ref[...], 0.0)
        out = jnp.dot(h.astype(w2_ref.dtype), w2_ref[...],
                      preferred_element_type=jnp.float32)
        o_ref[...] = jnp.exp(out + b2_ref[...]).astype(o_ref.dtype)


# --------------------------------------------------------------------------- #
# Wrapper                                                                      #
# --------------------------------------------------------------------------- #
@functools.partial(jax.jit, static_argnames=("block_m", "block_k"))
def lin_forward(x, w1, b1, w2, b2, *, block_m=None, block_k=None):
    B, D_in = x.shape
    H = w1.shape[1]
    D_out = w2.shape[1]
    w_dtype = w1.dtype

    # ---- lane-dense feature dims ---------------------------------------------
    # Pad hidden/output feature dims to multiples of 128: the (block_m, H)
    # intermediate stays lane-dense and output writes are unmasked full-lane
    # stores.  Zero padding is exact: padded hidden units are relu(0)=0 feeding
    # zero W2 rows; padded output columns are sliced off below.
    H_pad = _round_up(H, _LANE)
    D_out_p = _round_up(D_out, _LANE)
    if H_pad != H:
        w1 = jnp.pad(w1, ((0, 0), (0, H_pad - H)))
        b1 = jnp.pad(b1, ((0, 0), (0, H_pad - H)))
        w2 = jnp.pad(w2, ((0, H_pad - H), (0, 0)))
    if D_out_p != D_out:
        w2 = jnp.pad(w2, ((0, 0), (0, D_out_p - D_out)))
        b2 = jnp.pad(b2, ((0, 0), (0, D_out_p - D_out)))

    # ---- generation-aware VMEM budget ------------------------------------------
    try:
        vmem_cap = int(pltpu.get_tpu_info().vmem_capacity_bytes)
    except Exception:  # conservative cross-generation fallback
        vmem_cap = 64 * 1024 * 1024
    vmem_budget = (vmem_cap * 3) // 4          # headroom for compiler scratch

    def vmem_needed(bm, bk, nk):
        w1_bufs = 1 if nk == 1 else 2          # W1 pipelines only when K-tiled
        acc = 0 if nk == 1 else _tile_bytes((bm, H_pad), jnp.float32)
        return (2 * _tile_bytes((bm, bk), x.dtype)                 # x tiles
                + w1_bufs * _tile_bytes((bk, H_pad), w_dtype)
                + _tile_bytes((1, H_pad), b1.dtype)
                + _tile_bytes((H_pad, D_out_p), w_dtype)
                + _tile_bytes((1, D_out_p), b2.dtype)
                + 2 * _tile_bytes((bm, D_out_p), jnp.float32)      # out tiles
                + 2 * _tile_bytes((bm, H_pad), jnp.float32)        # h / out temps
                + acc)

    # ---- batch tile ------------------------------------------------------------
    resident_w_bytes = (_tile_bytes((D_in, H_pad), w_dtype)
                        + _tile_bytes((H_pad, D_out_p), w_dtype))
    if block_m is None:
        if B <= 128:
            block_m = _round_up(max(B, 1), _SUBLANE)
        else:
            # Keep >= 2 batch tiles so the "parallel" axis can shard across both
            # v7x TensorCores; grow tiles when the resident weights are tiny to
            # amortize the ~0.35us per-grid-step pipeline overhead.
            cap = 1024 if resident_w_bytes < (4 << 20) else 256
            block_m = min(cap, max(128, _round_up(pl.cdiv(B, 2), _SUBLANE)))
    else:
        block_m = _round_up(max(block_m, 1), _SUBLANE)
    block_m = min(block_m, _round_up(B, _SUBLANE))

    # ---- reduction (D_in) tile ---------------------------------------------------
    if block_k is None:
        block_k = D_in
        if vmem_needed(block_m, D_in, 1) > vmem_budget and D_in > 512:
            block_k = 512                      # fall back to a K-tiled reduction
    elif block_k != D_in:
        block_k = min(_round_up(block_k, _LANE), _round_up(D_in, _LANE))

    if block_k == D_in:
        D_in_p, num_k = D_in, 1
    else:
        D_in_p = _round_up(D_in, block_k)
        num_k = D_in_p // block_k
        if D_in_p != D_in:                     # zero-pad K: contributes exact 0s
            x = jnp.pad(x, ((0, 0), (0, D_in_p - D_in)))
            w1 = jnp.pad(w1, ((0, D_in_p - D_in), (0, 0)))

    # Last-resort shrink of the batch tile if the tiles still exceed the budget.
    # TODO(synk): tile H / D_out (second accumulator axis) when even K-tiled
    # weights exceed the VMEM budget on v7x (64 MiB).
    while vmem_needed(block_m, block_k, num_k) > vmem_budget and block_m > 128:
        block_m = _round_up(block_m // 2, _SUBLANE)

    grid_m = pl.cdiv(B, block_m)               # ragged last tile -> masked stores
    needed = vmem_needed(block_m, block_k, num_k)
    vmem_limit = min(vmem_budget, max((needed * 5) // 4, 32 * 1024 * 1024))
    vmem_limit = max(vmem_limit, needed)

    cost = pl.CostEstimate(
        flops=2 * B * (D_in_p * H_pad + H_pad * D_out_p),
        transcendentals=B * D_out_p,
        bytes_accessed=(x.size * x.dtype.itemsize
                        + w1.size * w1.dtype.itemsize
                        + b1.size * b1.dtype.itemsize
                        + w2.size * w2.dtype.itemsize
                        + b2.size * b2.dtype.itemsize
                        + B * D_out_p * 4),
    )

    if num_k == 1:
        kernel = lin_kernel_fused
        grid = (grid_m,)
        in_specs = [
            pl.BlockSpec((block_m, block_k), lambda i: (i, 0)),      # x tile
            _resident_spec((block_k, H_pad), lambda i: (0, 0)),      # W1 (resident)
            _resident_spec((1, H_pad), lambda i: (0, 0)),            # b1
            _resident_spec((H_pad, D_out_p), lambda i: (0, 0)),      # W2 (resident)
            _resident_spec((1, D_out_p), lambda i: (0, 0)),          # b2
        ]
        out_spec = pl.BlockSpec((block_m, D_out_p), lambda i: (i, 0))
        scratch = []
        semantics = ("parallel",)
    else:
        kernel = lin_kernel_ktiled
        grid = (grid_m, num_k)
        in_specs = [
            pl.BlockSpec((block_m, block_k), lambda i, k: (i, k)),   # x K-tile
            pl.BlockSpec((block_k, H_pad), lambda i, k: (k, 0)),     # W1 K-tile
            _resident_spec((1, H_pad), lambda i, k: (0, 0)),         # b1
            _resident_spec((H_pad, D_out_p), lambda i, k: (0, 0)),   # W2 (resident)
            _resident_spec((1, D_out_p), lambda i, k: (0, 0)),       # b2
        ]
        out_spec = pl.BlockSpec((block_m, D_out_p), lambda i, k: (i, 0))
        scratch = [pltpu.VMEM((block_m, H_pad), jnp.float32)]
        semantics = ("parallel", "arbitrary")

    out = pl.pallas_call(
        kernel,
        out_shape=jax.ShapeDtypeStruct((B, D_out_p), jnp.float32),
        grid_spec=pltpu.PrefetchScalarGridSpec(
            num_scalar_prefetch=0,
            grid=grid,
            in_specs=in_specs,
            out_specs=out_spec,
            scratch_shapes=scratch,
        ),
        compiler_params=pltpu.CompilerParams(
            dimension_semantics=semantics,
            vmem_limit_bytes=int(vmem_limit)),
        cost_estimate=cost,
    )(x, w1, b1, w2, b2)

    # Rows are exact (no batch pad); only slice the feature dim that was padded.
    return out if D_out_p == D_out else out[:, :D_out]


def init_linear_params(key, in_features, out_features, dtype=jnp.float32):
    # Mimic PyTorch nn.Linear default init: U(-1/sqrt(fan_in), 1/sqrt(fan_in)).
    kw, kb = jax.random.split(key)
    bound = 1.0 / jnp.sqrt(jnp.float32(in_features))
    # Stored as (in_features, out_features) == W^T relative to PyTorch.
    w = jax.random.uniform(kw, (in_features, out_features), jnp.float32,
                           minval=-bound, maxval=bound).astype(dtype)
    b = jax.random.uniform(kb, (1, out_features), jnp.float32,
                           minval=-bound, maxval=bound)
    return w, b


if __name__ == "__main__":
    key = jax.random.PRNGKey(0)
    kx, k1, k2 = jax.random.split(key, 3)

    def ref_forward(x, w1, b1, w2, b2):
        return jnp.exp(jnp.maximum(x @ w1 + b1, 0.0) @ w2 + b2)

    # --- 1) small single-tile f32 path (the module's natural shapes) ----------
    input_dim, hidden_dim, output_dim = 16, 32, 8
    batch = 16
    x = jax.random.normal(kx, (batch, input_dim), jnp.float32)
    w1, b1 = init_linear_params(k1, input_dim, hidden_dim)
    w2, b2 = init_linear_params(k2, hidden_dim, output_dim)

    out = jax.block_until_ready(lin_forward(x, w1, b1, w2, b2))
    ref = ref_forward(x, w1, b1, w2, b2)
    assert out.shape == (batch, output_dim)
    assert jnp.allclose(out, ref, rtol=1e-5, atol=1e-5)

    # --- 2) ragged multi-tile batch (no wrapper pad; masked edge-tile stores) --
    batch2 = 300
    x2 = jax.random.normal(kx, (batch2, input_dim), jnp.float32)
    out2 = jax.block_until_ready(lin_forward(x2, w1, b1, w2, b2, block_m=128))
    ref2 = ref_forward(x2, w1, b1, w2, b2)
    assert out2.shape == (batch2, output_dim)
    assert jnp.allclose(out2, ref2, rtol=1e-5, atol=1e-5)

    # --- 3) K-tiled reduction path (f32 accumulator + pl.when init/finalize) ---
    d_in3, h3, d_out3, batch3 = 200, 256, 8, 64
    x3 = jax.random.normal(kx, (batch3, d_in3), jnp.float32)
    w1_3, b1_3 = init_linear_params(k1, d_in3, h3)
    w2_3, b2_3 = init_linear_params(k2, h3, d_out3)
    out3 = jax.block_until_ready(
        lin_forward(x3, w1_3, b1_3, w2_3, b2_3, block_k=128))
    ref3 = ref_forward(x3, w1_3, b1_3, w2_3, b2_3)
    assert out3.shape == (batch3, d_out3)
    assert jnp.allclose(out3, ref3, rtol=1e-3, atol=1e-3)

    # --- 4) bf16 weights-at-rest (in-kernel x cast, f32 accumulation) ----------
    w1_bf = w1.astype(jnp.bfloat16)
    w2_bf = w2.astype(jnp.bfloat16)
    out4 = jax.block_until_ready(lin_forward(x, w1_bf, b1, w2_bf, b2))
    ref4 = ref_forward(x, w1_bf.astype(jnp.float32), b1,
                       w2_bf.astype(jnp.float32), b2)
    assert out4.shape == (batch, output_dim)
    assert jnp.allclose(out4, ref4, rtol=5e-2, atol=5e-2)

    print("KERNEL_OK")
</pallas_src>

<mosaic_0001>
module attributes {stable_mosaic.version = 11 : i64} {
  func.func @lin_kernel_fused(%arg0: i32, %arg1: memref<16x16xf32, #tpu.memory_space<vmem>>, %arg2: memref<16x128xf32, #tpu.memory_space<vmem>>, %arg3: memref<1x128xf32, #tpu.memory_space<vmem>>, %arg4: memref<128x128xf32, #tpu.memory_space<vmem>>, %arg5: memref<1x128xf32, #tpu.memory_space<vmem>>, %arg6: memref<16x128xf32, #tpu.memory_space<vmem>>) attributes {dimension_semantics = [#tpu.dimension_semantics<parallel>], iteration_bounds = array<i64: 1>, scalar_prefetch = 0 : i64, scratch_operands = 0 : i64, tpu.core_type = #tpu.core_type<tc>, window_params = [{transform_indices = @transform_0, window_bounds = array<i64: 16, 16>}, {pipeline_mode = #tpu.pipeline_mode<synchronous>, transform_indices = @transform_1, window_bounds = array<i64: 16, 128>}, {pipeline_mode = #tpu.pipeline_mode<synchronous>, transform_indices = @transform_2, window_bounds = array<i64: 1, 128>}, {pipeline_mode = #tpu.pipeline_mode<synchronous>, transform_indices = @transform_3, window_bounds = array<i64: 128, 128>}, {pipeline_mode = #tpu.pipeline_mode<synchronous>, transform_indices = @transform_4, window_bounds = array<i64: 1, 128>}, {transform_indices = @transform_5, window_bounds = array<i64: 16, 128>}]} {
    %c0 = arith.constant 0 : index
    %c0_0 = arith.constant 0 : index
    %0 = vector.load %arg1[%c0, %c0_0] : memref<16x16xf32, #tpu.memory_space<vmem>>, vector<16x16xf32>
    %c0_1 = arith.constant 0 : index
    %c0_2 = arith.constant 0 : index
    %1 = vector.load %arg2[%c0_1, %c0_2] : memref<16x128xf32, #tpu.memory_space<vmem>>, vector<16x128xf32>
    %cst = arith.constant dense<0.000000e+00> : vector<16x128xf32>
    %2 = tpu.matmul %0, %1, %cst {dimension_numbers = #tpu.dot_dimension_numbers<[1], [0], [0], [1], [0, 0, 1, 1], [], []>} : vector<16x16xf32>, vector<16x128xf32>, vector<16x128xf32> -> vector<16x128xf32>
    %c0_3 = arith.constant 0 : index
    %c0_4 = arith.constant 0 : index
    %3 = vector.load %arg3[%c0_3, %c0_4] : memref<1x128xf32, #tpu.memory_space<vmem>>, vector<1x128xf32>
    %4 = vector.broadcast %3 : vector<1x128xf32> to vector<16x128xf32>
    %5 = arith.addf %2, %4 : vector<16x128xf32>
    %cst_5 = arith.constant 0.000000e+00 : f32
    %6 = vector.broadcast %cst_5 : f32 to vector<16x128xf32>
    %7 = arith.maximumf %5, %6 : vector<16x128xf32>
    %c0_6 = arith.constant 0 : index
    %c0_7 = arith.constant 0 : index
    %8 = vector.load %arg4[%c0_6, %c0_7] : memref<128x128xf32, #tpu.memory_space<vmem>>, vector<128x128xf32>
    %cst_8 = arith.constant dense<0.000000e+00> : vector<16x128xf32>
    %9 = tpu.matmul %7, %8, %cst_8 {dimension_numbers = #tpu.dot_dimension_numbers<[1], [0], [0], [1], [0, 0, 1, 1], [], []>} : vector<16x128xf32>, vector<128x128xf32>, vector<16x128xf32> -> vector<16x128xf32>
    %c0_9 = arith.constant 0 : index
    %c0_10 = arith.constant 0 : index
    %10 = vector.load %arg5[%c0_9, %c0_10] : memref<1x128xf32, #tpu.memory_space<vmem>>, vector<1x128xf32>
    %11 = vector.broadcast %10 : vector<1x128xf32> to vector<16x128xf32>
    %12 = arith.addf %9, %11 : vector<16x128xf32>
    %13 = math.exp %12 : vector<16x128xf32>
    %c0_11 = arith.constant 0 : index
    %c0_12 = arith.constant 0 : index
    %14 = vector.load %arg6[%c0_11, %c0_12] : memref<16x128xf32, #tpu.memory_space<vmem>>, vector<16x128xf32>
    tpu.vector_store %arg6[%c0_11, %c0_12], %13 {strides = array<i32>} : memref<16x128xf32, #tpu.memory_space<vmem>>, vector<16x128xf32>,
    return
  }
  func.func @transform_0(%arg0: i32) -> (i32, i32) {
    %c0_i32 = arith.constant 0 : i32
    %c0_i32_0 = arith.constant 0 : i32
    return %arg0, %c0_i32 : i32, i32
  }
  func.func @transform_1(%arg0: i32) -> (i32, i32) {
    %c0_i32 = arith.constant 0 : i32
    %c0_i32_0 = arith.constant 0 : i32
    %c0_i32_1 = arith.constant 0 : i32
    return %c0_i32, %c0_i32_0 : i32, i32
  }
  func.func @transform_2(%arg0: i32) -> (i32, i32) {
    %c0_i32 = arith.constant 0 : i32
    %c0_i32_0 = arith.constant 0 : i32
    %c0_i32_1 = arith.constant 0 : i32
    return %c0_i32, %c0_i32_0 : i32, i32
  }
  func.func @transform_3(%arg0: i32) -> (i32, i32) {
    %c0_i32 = arith.constant 0 : i32
    %c0_i32_0 = arith.constant 0 : i32
    %c0_i32_1 = arith.constant 0 : i32
    return %c0_i32, %c0_i32_0 : i32, i32
  }
  func.func @transform_4(%arg0: i32) -> (i32, i32) {
    %c0_i32 = arith.constant 0 : i32
    %c0_i32_0 = arith.constant 0 : i32
    %c0_i32_1 = arith.constant 0 : i32
    return %c0_i32, %c0_i32_0 : i32, i32
  }
  func.func @transform_5(%arg0: i32) -> (i32, i32) {
    %c0_i32 = arith.constant 0 : i32
    %c0_i32_0 = arith.constant 0 : i32
    return %arg0, %c0_i32 : i32, i32
  }
}

</mosaic_0001>

<llo_original>
// kernel: lin_forward.1
$region0: #{lin_forward.1}
  #allocation0 [shape = 'u32[]', space=smem, size = 0x4, offset = 0x4, fixed_abs, tag = 'smem constant byte address 0x4 - core index']
  #allocation1 [shape = 'u32[144,128]{1,0:T(1,128)}', space=vmem, size = 0x12000, scoped, tag = 'internal scratch']
  %s0 = inlined_call_operand.vmem [shape: f32[16,16], index: 0, kind: input, shape index: {}]
  %s1 = inlined_call_operand.vmem [shape: f32[16,128], index: 1, kind: input, shape index: {}]
  %s2 = inlined_call_operand.vmem [shape: f32[1,128], index: 2, kind: input, shape index: {}]
  %s3 = inlined_call_operand.vmem [shape: f32[128,128], index: 3, kind: input, shape index: {}]
  %s4 = inlined_call_operand.vmem [shape: f32[1,128], index: 4, kind: input, shape index: {}]
  %s5 = inlined_call_operand.vmem [shape: f32[16,128], index: 5, kind: output, shape index: {}]
  %s6 = sld [smem:[#allocation0]]
  $region30: #{lin_forward.1} parent=0
    _
  %s8 = ssub.s32 1, %s6
  %s9 = scalar_select 0, %s8, %s6
  // Predicated region
  $region2: #{lin_forward.1} parent=0 // pred_check
    _
  $region3: #{lin_forward.1} parent=0 // pred_check_branch
    %11 = sbr.rel (0) target = $region5
  $region4: #{lin_forward.1} parent=0 // pred_region
    _
  $region5: #{lin_forward.1} parent=0 // pred_fallthru
    _
  // Predicated region
  $region6: #{lin_forward.1} parent=0 // pred_check
    _
  $region7: #{lin_forward.1} parent=0 // pred_check_branch
    %13 = sbr.rel (0) target = $region9
  $region8: #{lin_forward.1} parent=0 // pred_region
    _
  $region9: #{lin_forward.1} parent=0 // pred_fallthru
    _
  // Predicated region
  $region10: #{lin_forward.1} parent=0 // pred_check
    _
  $region11: #{lin_forward.1} parent=0 // pred_check_branch
    %15 = sbr.rel (0) target = $region13
  $region12: #{lin_forward.1} parent=0 // pred_region
    _
  $region13: #{lin_forward.1} parent=0 // pred_fallthru
    _
  // Predicated region
  $region14: #{lin_forward.1} parent=0 // pred_check
    _
  $region15: #{lin_forward.1} parent=0 // pred_check_branch
    %17 = sbr.rel (0) target = $region17
  $region16: #{lin_forward.1} parent=0 // pred_region
    _
  $region17: #{lin_forward.1} parent=0 // pred_fallthru
    _
  // Predicated region
  $region18: #{lin_forward.1} parent=0 // pred_check
    _
  $region19: #{lin_forward.1} parent=0 // pred_check_branch
    %19 = sbr.rel (0) target = $region21
  $region20: #{lin_forward.1} parent=0 // pred_region
    _
  $region21: #{lin_forward.1} parent=0 // pred_fallthru
    _
  %v20 = vld [vmem:[%s0] sm:$0xff]
  %v21 = vld [vmem:[%s0 + $0x8] sm:$0xff]
  %v22 = vld [vmem:[%s1] sm:$0xff]
  %v23 = vld [vmem:[%s1 + $0x8] sm:$0xff]
  %v24 = vld [vmem:[%s2] sm:$0x1]
  %v26 = vlaneseq
  %v27 = vshrl.u32 %v26, 7
  %v28 = vsub.s32 0, %v27
  %v29 = vrot.slane %v24, %v28
  %vm31 = vcmask 130048
  %v33 = vsel %vm31, %v20, 0
  %v36 = vsel %vm31, %v21, 0
  %38 = vmatprep.subr.mxu0 0.0
  %39 = vmatpush1.msra.mxu0 %v22
  %40 = vmatprep.subr.mxu0 0.0
  %41 = vmatpush1.msra.mxu0 %v23
  %42 = vmatprep.subr.mxu0 0.0
  %43 = vmatpush1.msra.mxu0 0.0
  %44 = vmatprep.subr.mxu0 0.0
  %45 = vmatpush1.msra.mxu0 0.0
  %46 = vmatprep.subr.mxu0 0.0
  %47 = vmatpush1.msra.mxu0 0.0
  %48 = vmatprep.subr.mxu0 0.0
  %49 = vmatpush1.msra.mxu0 0.0
  %50 = vmatprep.subr.mxu0 0.0
  %51 = vmatpush1.msra.mxu0 0.0
  %52 = vmatprep.subr.mxu0 0.0
  %53 = vmatpush1.msra.mxu0 0.0
  %54 = vmatprep.subr.mxu0 0.0
  %55 = vmatpush1.msra.mxu0 0.0
  %56 = vmatprep.subr.mxu0 0.0
  %57 = vmatpush1.msra.mxu0 0.0
  %58 = vmatprep.subr.mxu0 0.0
  %59 = vmatpush1.msra.mxu0 0.0
  %60 = vmatprep.subr.mxu0 0.0
  %61 = vmatpush1.msra.mxu0 0.0
  %62 = vmatprep.subr.mxu0 0.0
  %63 = vmatpush1.msra.mxu0 0.0
  %64 = vmatprep.subr.mxu0 0.0
  %65 = vmatpush1.msra.mxu0 0.0
  %66 = vmatprep.subr.mxu0 0.0
  %67 = vmatpush1.msra.mxu0 0.0
  %68 = vmatprep.subr.mxu0 0.0
  %69 = vmatpush1.msra.mxu0 0.0
  %70 = vmatprep.subr.mxu0 0.0
  %71 = vmatpush1.msra.mxu0 0.0
  %72 = vmatprep.subr.mxu0 0.0
  %73 = vmatpush1.msra.mxu0 0.0
  %74 = vmatprep.subr.mxu0 0.0
  %75 = vmatpush1.msra.mxu0 0.0
  %76 = vmatprep.subr.mxu0 0.0
  %77 = vmatpush1.msra.mxu0 0.0
  %78 = vmatprep.subr.mxu0 0.0
  %79 = vmatpush1.msra.mxu0 0.0
  %80 = vmatprep.subr.mxu0 0.0
  %81 = vmatpush1.msra.mxu0 0.0
  %82 = vmatprep.subr.mxu0 0.0
  %83 = vmatpush1.msra.mxu0 0.0
  %84 = vmatprep.subr.mxu0 0.0
  %85 = vmatpush1.msra.mxu0 0.0
  %86 = vmatprep.subr.mxu0 0.0
  %87 = vmatpush1.msra.mxu0 0.0
  %88 = vmatprep.subr.mxu0 0.0
  %89 = vmatpush1.msra.mxu0 0.0
  %90 = vmatprep.subr.mxu0 0.0
  %91 = vmatpush1.msra.mxu0 0.0
  %92 = vmatprep.subr.mxu0 0.0
  %93 = vmatpush1.msra.mxu0 0.0
  %94 = vmatprep.subr.mxu0 0.0
  %95 = vmatpush1.msra.mxu0 0.0
  %96 = vmatprep.subr.mxu0 0.0
  %97 = vmatpush1.msra.mxu0 0.0
  %98 = vmatprep.subr.mxu0 0.0
  %99 = vmatpush1.msra.mxu0 0.0
  %100 = vmatprep.subr.mxu0 0.0
  %101 = vmatpush1.msra.mxu0 0.0
  %102 = vmatprep.mubr.f32.mxu0 0.0
  %103 = vmatmul.mubr.f32.gmra.mrb[0].mxu0 %v33
  %v104 = vpop.f32.mrb[0].mxu0
  %v105 = vadd.f32 %v29, %v104
  %v106 = vpop.f32.mrb[0].mxu0
  %107 = vmatprep.mubr.f32.mxu0 0.0
  %108 = vmatmul.mubr.f32.gmra.mrb[0].mxu0 %v36
  %v109 = vpop.f32.mrb[0].mxu0
  %v110 = vadd.f32 %v29, %v109
  %v111 = vpop.f32.mrb[0].mxu0
  %112 = vdwg.mxu0
  %v113 = vmax.f32 %v105, 0.0
  %v114 = vmax.f32 %v110, 0.0
  %v115 = vld [vmem:[%s3] sm:$0xff]
  %v116 = vld [vmem:[%s3 + $0x8] sm:$0xff]
  %v117 = vld [vmem:[%s3 + $0x10] sm:$0xff]
  %v118 = vld [vmem:[%s3 + $0x18] sm:$0xff]
  %v119 = vld [vmem:[%s3 + $0x20] sm:$0xff]
  %v120 = vld [vmem:[%s3 + $0x28] sm:$0xff]
  %v121 = vld [vmem:[%s3 + $0x30] sm:$0xff]
  %v122 = vld [vmem:[%s3 + $0x38] sm:$0xff]
  %v123 = vld [vmem:[%s3 + $0x40] sm:$0xff]
  %v124 = vld [vmem:[%s3 + $0x48] sm:$0xff]
  %v125 = vld [vmem:[%s3 + $0x50] sm:$0xff]
  %v126 = vld [vmem:[%s3 + $0x58] sm:$0xff]
  %v127 = vld [vmem:[%s3 + $0x60] sm:$0xff]
  %v128 = vld [vmem:[%s3 + $0x68] sm:$0xff]
  %v129 = vld [vmem:[%s3 + $0x70] sm:$0xff]
  %v130 = vld [vmem:[%s3 + $0x78] sm:$0xff]
  %v131 = vld [vmem:[%s4] sm:$0x1]
  %v133 = vlaneseq
  %v134 = vshrl.u32 %v133, 7
  %v135 = vsub.s32 0, %v134
  %v136 = vrot.slane %v131, %v135
  %138 = vmatprep.subr.mxu0 0.0
  %139 = vmatpush1.msra.mxu0 %v115
  %140 = vmatprep.subr.mxu0 0.0
  %141 = vmatpush1.msra.mxu0 %v116
  %142 = vmatprep.subr.mxu0 0.0
  %143 = vmatpush1.msra.mxu0 %v117
  %144 = vmatprep.subr.mxu0 0.0
  %145 = vmatpush1.msra.mxu0 %v118
  %146 = vmatprep.subr.mxu0 0.0
  %147 = vmatpush1.msra.mxu0 %v119
  %148 = vmatprep.subr.mxu0 0.0
  %149 = vmatpush1.msra.mxu0 %v120
  %150 = vmatprep.subr.mxu0 0.0
  %151 = vmatpush1.msra.mxu0 %v121
  %152 = vmatprep.subr.mxu0 0.0
  %153 = vmatpush1.msra.mxu0 %v122
  %154 = vmatprep.subr.mxu0 0.0
  %155 = vmatpush1.msra.mxu0 %v123
  %156 = vmatprep.subr.mxu0 0.0
  %157 = vmatpush1.msra.mxu0 %v124
  %158 = vmatprep.subr.mxu0 0.0
  %159 = vmatpush1.msra.mxu0 %v125
  %160 = vmatprep.subr.mxu0 0.0
  %161 = vmatpush1.msra.mxu0 %v126
  %162 = vmatprep.subr.mxu0 0.0
  %163 = vmatpush1.msra.mxu0 %v127
  %164 = vmatprep.subr.mxu0 0.0
  %165 = vmatpush1.msra.mxu0 %v128
  %166 = vmatprep.subr.mxu0 0.0
  %167 = vmatpush1.msra.mxu0 %v129
  %168 = vmatprep.subr.mxu0 0.0
  %169 = vmatpush1.msra.mxu0 %v130
  %170 = vmatprep.subr.mxu0 0.0
  %171 = vmatpush1.msra.mxu0 0.0
  %172 = vmatprep.subr.mxu0 0.0
  %173 = vmatpush1.msra.mxu0 0.0
  %174 = vmatprep.subr.mxu0 0.0
  %175 = vmatpush1.msra.mxu0 0.0
  %176 = vmatprep.subr.mxu0 0.0
  %177 = vmatpush1.msra.mxu0 0.0
  %178 = vmatprep.subr.mxu0 0.0
  %179 = vmatpush1.msra.mxu0 0.0
  %180 = vmatprep.subr.mxu0 0.0
  %181 = vmatpush1.msra.mxu0 0.0
  %182 = vmatprep.subr.mxu0 0.0
  %183 = vmatpush1.msra.mxu0 0.0
  %184 = vmatprep.subr.mxu0 0.0
  %185 = vmatpush1.msra.mxu0 0.0
  %186 = vmatprep.subr.mxu0 0.0
  %187 = vmatpush1.msra.mxu0 0.0
  %188 = vmatprep.subr.mxu0 0.0
  %189 = vmatpush1.msra.mxu0 0.0
  %190 = vmatprep.subr.mxu0 0.0
  %191 = vmatpush1.msra.mxu0 0.0
  %192 = vmatprep.subr.mxu0 0.0
  %193 = vmatpush1.msra.mxu0 0.0
  %194 = vmatprep.subr.mxu0 0.0
  %195 = vmatpush1.msra.mxu0 0.0
  %196 = vmatprep.subr.mxu0 0.0
  %197 = vmatpush1.msra.mxu0 0.0
  %198 = vmatprep.subr.mxu0 0.0
  %199 = vmatpush1.msra.mxu0 0.0
  %200 = vmatprep.subr.mxu0 0.0
  %201 = vmatpush1.msra.mxu0 0.0
  %202 = vmatprep.mubr.f32.mxu0 0.0
  %203 = vmatmul.mubr.f32.gmra.mrb[0].mxu0 %v113
  %v204 = vpop.f32.mrb[0].mxu0
  %v205 = vadd.f32 %v136, %v204
  %v206 = vpop.f32.mrb[0].mxu0
  %207 = vmatprep.mubr.f32.mxu0 0.0
  %208 = vmatmul.mubr.f32.gmra.mrb[0].mxu0 %v114
  %v209 = vpop.f32.mrb[0].mxu0
  %v210 = vadd.f32 %v136, %v209
  %v211 = vpop.f32.mrb[0].mxu0
  %212 = vdwg.mxu0
  %v213 = vmul.f32 %v205, 1.442695
  %v214 = vpow.pop %v213
  %v215 = vmul.f32 %v210, 1.442695
  %v216 = vpow.pop %v215
  %217 = vst [vmem:[%s5] sm:$0xff] %v214
  %218 = vst [vmem:[%s5 + $0x8] sm:$0xff] %v216
  // Predicated region
  $region22: #{lin_forward.1} parent=0 // pred_check
    _
  $region23: #{lin_forward.1} parent=0 // pred_check_branch
    %220 = sbr.rel (0) target = $region25
  $region24: #{lin_forward.1} parent=0 // pred_region
    _
  $region25: #{lin_forward.1} parent=0 // pred_fallthru
    _
  // Predicated region
  $region26: #{lin_forward.1} parent=0 // pred_check
    _
  $region27: #{lin_forward.1} parent=0 // pred_check_branch
    %222 = sbr.rel (0) target = $region29
  $region28: #{lin_forward.1} parent=0 // pred_region
    _
  $region29: #{lin_forward.1} parent=0 // pred_fallthru
    _

</llo_original>
